<compile_context>
chip_gen: v5e
topology: v5e:2x2
jax: 0.10.0
libtpu: 0.0.40
codegen_flags: <defaults>
</compile_context>

<pallas_src>
import jax
import jax.numpy as jnp
from jax.experimental import pallas as pl
from jax.experimental.pallas import tpu as pltpu


def _make_patch_kernel(C, H, W, p, emb, compute_dtype):
    h = H // p                 # patch rows per image
    w = W // p                 # patches per row
    n_patches = h * w
    cp = C * p                 # columns per p2-group in L (order: c major, p1 minor)
    patch_dim = p * p * C

    def kernel(x_ref, w_ref, b_ref, o_ref, g_ref, l_ref):
        # x_ref: (1, C, H, W)          one image (pipelined/double-buffered)
        # w_ref: (patch_dim, emb)      resident weight, K order (p2, c, p1)
        # b_ref: (1, emb) f32          resident bias row
        # o_ref: (1, h*w, emb)         output block
        # g_ref: (h*W, C*p) scratch    rows = (hi, wi, p2), cols = (c, p1)
        # l_ref: (h*w, patch_dim)      assembled patch matrix

        # Phase 1: NCHW slabs -> transposed column blocks.
        # g[hi*W + (wi*p + p2), c*p + p1] = x[0, c, hi*p + p1, wi*p + p2]
        for hi in range(h):
            for c in range(C):
                tile = x_ref[0, c, hi * p:(hi + 1) * p, :]          # (p, W)
                g_ref[hi * W:(hi + 1) * W, c * p:(c + 1) * p] = jnp.transpose(tile)

        # Phase 2: de-interleave the (wi, p2) row mix with sublane-strided
        # loads and assemble L row-by-row-of-K:
        # l[hi*w + wi, p2*C*p + c*p + p1] = x[0, c, hi*p + p1, wi*p + p2]
        for p2 in range(p):
            l_ref[:, p2 * cp:(p2 + 1) * cp] = g_ref[pl.ds(p2, n_patches, stride=p), :]

        # Phase 3: single MXU matmul (f32 accumulate) + bias, cast on store.
        acc = jnp.dot(l_ref[...].astype(compute_dtype), w_ref[...],
                      preferred_element_type=jnp.float32)
        o_ref[0, :, :] = (acc + b_ref[...]).astype(o_ref.dtype)

    return kernel


def patch_forward(x, weight, bias, patch_size, *,
                  compute_dtype=jnp.bfloat16, out_dtype=None):
    """ViT patch embedding, rearrange fused into the kernel.

    x:      (B, C, H, W) NCHW
    weight: (emb, patch_dim)  -- PyTorch nn.Linear layout (out, in)
    bias:   (emb,)
    Returns (B, num_patches, emb) in `out_dtype` (default: x.dtype).
    """
    B, C, H, W = x.shape
    p = patch_size
    assert H % p == 0 and W % p == 0, "H and W must be divisible by patch_size"
    assert p % 8 == 0, "kernel assumes patch_size is a multiple of 8 (TPU sublanes)"
    h, w = H // p, W // p
    n_patches = h * w
    patch_dim = p * p * C
    emb = weight.shape[0]
    out_dtype = x.dtype if out_dtype is None else out_dtype

    # One-time host-side weight relayout to the kernel's K order (p2, c, p1):
    #   w_perm[p2*C*p + c*p + p1, e] = weight[e, p1*p*C + p2*C + c]
    w_perm = jnp.transpose(weight.reshape(emb, p, p, C), (2, 3, 1, 0))
    w_perm = w_perm.reshape(patch_dim, emb).astype(compute_dtype)
    b2d = bias.reshape(1, emb).astype(jnp.float32)

    kernel = _make_patch_kernel(C, H, W, p, emb, compute_dtype)

    cost = pl.CostEstimate(
        flops=2 * B * n_patches * patch_dim * emb,
        transcendentals=0,
        bytes_accessed=(x.size * x.dtype.itemsize                       # x (read once)
                        + patch_dim * emb * jnp.dtype(compute_dtype).itemsize
                        + emb * 4                                        # bias
                        + B * n_patches * emb * jnp.dtype(out_dtype).itemsize),
    )

    out = pl.pallas_call(
        kernel,
        out_shape=jax.ShapeDtypeStruct((B, n_patches, emb), out_dtype),
        grid=(B,),
        in_specs=[
            # One raw NCHW image per step; last two block dims = full (H, W).
            pl.BlockSpec((1, C, H, W), lambda b: (b, 0, 0, 0)),
            # Weight / bias: constant index_map -> fetched once, stay resident.
            pl.BlockSpec((patch_dim, emb), lambda b: (0, 0)),
            pl.BlockSpec((1, emb), lambda b: (0, 0)),
        ],
        # emb is the full last dim -> lane-dense, unmasked output stores.
        out_specs=pl.BlockSpec((1, n_patches, emb), lambda b: (b, 0, 0)),
        scratch_shapes=[
            pltpu.VMEM((h * W, C * p), x.dtype),          # g: transposed slabs
            pltpu.VMEM((n_patches, patch_dim), x.dtype),  # l: patch matrix
        ],
        compiler_params=pltpu.CompilerParams(
            # Independent images -> megacore sharding on v7x (grid has B steps).
            dimension_semantics=("parallel",),
        ),
        cost_estimate=cost,
    )(x, w_perm, b2d)
    return out


if __name__ == "__main__":
    # Module config matching Patch(in_channel=3, patch_size=8, emb_size=128)
    in_channel, patch_size, emb_size = 3, 8, 128
    B, H, W = 2, 16, 16                 # -> 2x2 = 4 patches per image
    patch_dim = patch_size * patch_size * in_channel

    key = jax.random.PRNGKey(0)
    kx, kw, kb = jax.random.split(key, 3)
    x = jax.random.normal(kx, (B, in_channel, H, W), dtype=jnp.float32)
    # Deterministic synthetic params (PyTorch Linear layout: (out, in))
    weight = jax.random.normal(kw, (emb_size, patch_dim), dtype=jnp.float32) * 0.02
    bias = jax.random.normal(kb, (emb_size,), dtype=jnp.float32) * 0.02

    # Pure-JAX reference of the same math (f32).
    h, w = H // patch_size, W // patch_size
    xr = x.reshape(B, in_channel, h, patch_size, w, patch_size)
    xr = jnp.transpose(xr, (0, 2, 4, 3, 5, 1)).reshape(B, h * w, patch_dim)
    ref = xr @ weight.T + bias

    # 1) f32 compute path (near-exact precision check).
    out_f32 = patch_forward(x, weight, bias, patch_size,
                            compute_dtype=jnp.float32)
    out_f32 = jax.block_until_ready(out_f32)
    assert out_f32.shape == (B, h * w, emb_size)
    assert jnp.allclose(out_f32, ref, atol=1e-3, rtol=1e-3)

    # 2) bf16 MXU inputs / f32 accumulate (recommended perf config).
    out_bf16 = patch_forward(x, weight, bias, patch_size,
                             compute_dtype=jnp.bfloat16)
    out_bf16 = jax.block_until_ready(out_bf16)
    assert out_bf16.shape == out_f32.shape
    assert jnp.allclose(out_bf16, ref, atol=5e-2, rtol=5e-2)

    # 3) bf16 output option (halves the output store stream).
    out_lo = patch_forward(x, weight, bias, patch_size,
                           compute_dtype=jnp.bfloat16, out_dtype=jnp.bfloat16)
    out_lo = jax.block_until_ready(out_lo)
    assert out_lo.dtype == jnp.bfloat16
    assert jnp.allclose(out_lo.astype(jnp.float32), ref, atol=5e-2, rtol=5e-2)

    print("KERNEL_OK")
</pallas_src>

<mosaic_0001>
module attributes {stable_mosaic.version = 11 : i64} {
  func.func @kernel(%arg0: i32, %arg1: memref<1x3x16x16xf32, #tpu.memory_space<vmem>>, %arg2: memref<192x128xf32, #tpu.memory_space<vmem>>, %arg3: memref<1x128xf32, #tpu.memory_space<vmem>>, %arg4: memref<1x4x128xf32, #tpu.memory_space<vmem>>, %arg5: memref<32x24xf32, #tpu.memory_space<vmem>>, %arg6: memref<4x192xf32, #tpu.memory_space<vmem>>) attributes {dimension_semantics = [#tpu.dimension_semantics<parallel>], iteration_bounds = array<i64: 2>, scalar_prefetch = 0 : i64, scratch_operands = 2 : i64, tpu.core_type = #tpu.core_type<tc>, window_params = [{transform_indices = @transform_0, window_bounds = array<i64: 1, 3, 16, 16>}, {pipeline_mode = #tpu.pipeline_mode<synchronous>, transform_indices = @transform_1, window_bounds = array<i64: 192, 128>}, {pipeline_mode = #tpu.pipeline_mode<synchronous>, transform_indices = @transform_2, window_bounds = array<i64: 1, 128>}, {transform_indices = @transform_3, window_bounds = array<i64: 1, 4, 128>}]} {
    %c0 = arith.constant 0 : index
    %c0_0 = arith.constant 0 : index
    %c0_1 = arith.constant 0 : index
    %c0_2 = arith.constant 0 : index
    %0 = vector.load %arg1[%c0, %c0_0, %c0_1, %c0_2] : memref<1x3x16x16xf32, #tpu.memory_space<vmem>>, vector<1x1x8x16xf32>
    %1 = vector.shape_cast %0 : vector<1x1x8x16xf32> to vector<8x16xf32>
    %2 = tpu.transpose %1, [1, 0] : vector<8x16xf32> -> vector<16x8xf32>
    %c0_3 = arith.constant 0 : index
    %c0_4 = arith.constant 0 : index
    %3 = vector.load %arg5[%c0_3, %c0_4] : memref<32x24xf32, #tpu.memory_space<vmem>>, vector<16x8xf32>
    tpu.vector_store %arg5[%c0_3, %c0_4], %2 {strides = array<i32>} : memref<32x24xf32, #tpu.memory_space<vmem>>, vector<16x8xf32>,
    %c0_5 = arith.constant 0 : index
    %c1 = arith.constant 1 : index
    %c0_6 = arith.constant 0 : index
    %c0_7 = arith.constant 0 : index
    %4 = vector.load %arg1[%c0_5, %c1, %c0_6, %c0_7] : memref<1x3x16x16xf32, #tpu.memory_space<vmem>>, vector<1x1x8x16xf32>
    %5 = vector.shape_cast %4 : vector<1x1x8x16xf32> to vector<8x16xf32>
    %6 = tpu.transpose %5, [1, 0] : vector<8x16xf32> -> vector<16x8xf32>
    %c0_8 = arith.constant 0 : index
    %c8 = arith.constant 8 : index
    %7 = vector.load %arg5[%c0_8, %c8] : memref<32x24xf32, #tpu.memory_space<vmem>>, vector<16x8xf32>
    tpu.vector_store %arg5[%c0_8, %c8], %6 {strides = array<i32>} : memref<32x24xf32, #tpu.memory_space<vmem>>, vector<16x8xf32>,
    %c0_9 = arith.constant 0 : index
    %c2 = arith.constant 2 : index
    %c0_10 = arith.constant 0 : index
    %c0_11 = arith.constant 0 : index
    %8 = vector.load %arg1[%c0_9, %c2, %c0_10, %c0_11] : memref<1x3x16x16xf32, #tpu.memory_space<vmem>>, vector<1x1x8x16xf32>
    %9 = vector.shape_cast %8 : vector<1x1x8x16xf32> to vector<8x16xf32>
    %10 = tpu.transpose %9, [1, 0] : vector<8x16xf32> -> vector<16x8xf32>
    %c0_12 = arith.constant 0 : index
    %c16 = arith.constant 16 : index
    %11 = vector.load %arg5[%c0_12, %c16] : memref<32x24xf32, #tpu.memory_space<vmem>>, vector<16x8xf32>
    tpu.vector_store %arg5[%c0_12, %c16], %10 {strides = array<i32>} : memref<32x24xf32, #tpu.memory_space<vmem>>, vector<16x8xf32>,
    %c0_13 = arith.constant 0 : index
    %c0_14 = arith.constant 0 : index
    %c8_15 = arith.constant 8 : index
    %c0_16 = arith.constant 0 : index
    %12 = vector.load %arg1[%c0_13, %c0_14, %c8_15, %c0_16] : memref<1x3x16x16xf32, #tpu.memory_space<vmem>>, vector<1x1x8x16xf32>
    %13 = vector.shape_cast %12 : vector<1x1x8x16xf32> to vector<8x16xf32>
    %14 = tpu.transpose %13, [1, 0] : vector<8x16xf32> -> vector<16x8xf32>
    %c16_17 = arith.constant 16 : index
    %c0_18 = arith.constant 0 : index
    %15 = vector.load %arg5[%c16_17, %c0_18] : memref<32x24xf32, #tpu.memory_space<vmem>>, vector<16x8xf32>
    tpu.vector_store %arg5[%c16_17, %c0_18], %14 {strides = array<i32>} : memref<32x24xf32, #tpu.memory_space<vmem>>, vector<16x8xf32>,
    %c0_19 = arith.constant 0 : index
    %c1_20 = arith.constant 1 : index
    %c8_21 = arith.constant 8 : index
    %c0_22 = arith.constant 0 : index
    %16 = vector.load %arg1[%c0_19, %c1_20, %c8_21, %c0_22] : memref<1x3x16x16xf32, #tpu.memory_space<vmem>>, vector<1x1x8x16xf32>
    %17 = vector.shape_cast %16 : vector<1x1x8x16xf32> to vector<8x16xf32>
    %18 = tpu.transpose %17, [1, 0] : vector<8x16xf32> -> vector<16x8xf32>
    %c16_23 = arith.constant 16 : index
    %c8_24 = arith.constant 8 : index
    %19 = vector.load %arg5[%c16_23, %c8_24] : memref<32x24xf32, #tpu.memory_space<vmem>>, vector<16x8xf32>
    tpu.vector_store %arg5[%c16_23, %c8_24], %18 {strides = array<i32>} : memref<32x24xf32, #tpu.memory_space<vmem>>, vector<16x8xf32>,
    %c0_25 = arith.constant 0 : index
    %c2_26 = arith.constant 2 : index
    %c8_27 = arith.constant 8 : index
    %c0_28 = arith.constant 0 : index
    %20 = vector.load %arg1[%c0_25, %c2_26, %c8_27, %c0_28] : memref<1x3x16x16xf32, #tpu.memory_space<vmem>>, vector<1x1x8x16xf32>
    %21 = vector.shape_cast %20 : vector<1x1x8x16xf32> to vector<8x16xf32>
    %22 = tpu.transpose %21, [1, 0] : vector<8x16xf32> -> vector<16x8xf32>
    %c16_29 = arith.constant 16 : index
    %c16_30 = arith.constant 16 : index
    %23 = vector.load %arg5[%c16_29, %c16_30] : memref<32x24xf32, #tpu.memory_space<vmem>>, vector<16x8xf32>
    tpu.vector_store %arg5[%c16_29, %c16_30], %22 {strides = array<i32>} : memref<32x24xf32, #tpu.memory_space<vmem>>, vector<16x8xf32>,
    %c0_31 = arith.constant 0 : index
    %c0_32 = arith.constant 0 : index
    %24 = tpu.strided_load %arg5[%c0_31, %c0_32] {strides = array<i32: 8, 1>} : memref<32x24xf32, #tpu.memory_space<vmem>>, vector<4x24xf32>
    %c0_33 = arith.constant 0 : index
    %c0_34 = arith.constant 0 : index
    %25 = vector.load %arg6[%c0_33, %c0_34] : memref<4x192xf32, #tpu.memory_space<vmem>>, vector<4x24xf32>
    tpu.vector_store %arg6[%c0_33, %c0_34], %24 {strides = array<i32>} : memref<4x192xf32, #tpu.memory_space<vmem>>, vector<4x24xf32>,
    %c1_35 = arith.constant 1 : index
    %c0_36 = arith.constant 0 : index
    %26 = tpu.strided_load %arg5[%c1_35, %c0_36] {strides = array<i32: 8, 1>} : memref<32x24xf32, #tpu.memory_space<vmem>>, vector<4x24xf32>
    %c0_37 = arith.constant 0 : index
    %c24 = arith.constant 24 : index
    %27 = vector.load %arg6[%c0_37, %c24] : memref<4x192xf32, #tpu.memory_space<vmem>>, vector<4x24xf32>
    tpu.vector_store %arg6[%c0_37, %c24], %26 {strides = array<i32>} : memref<4x192xf32, #tpu.memory_space<vmem>>, vector<4x24xf32>,
    %c2_38 = arith.constant 2 : index
    %c0_39 = arith.constant 0 : index
    %28 = tpu.strided_load %arg5[%c2_38, %c0_39] {strides = array<i32: 8, 1>} : memref<32x24xf32, #tpu.memory_space<vmem>>, vector<4x24xf32>
    %c0_40 = arith.constant 0 : index
    %c48 = arith.constant 48 : index
    %29 = vector.load %arg6[%c0_40, %c48] : memref<4x192xf32, #tpu.memory_space<vmem>>, vector<4x24xf32>
    tpu.vector_store %arg6[%c0_40, %c48], %28 {strides = array<i32>} : memref<4x192xf32, #tpu.memory_space<vmem>>, vector<4x24xf32>,
    %c3 = arith.constant 3 : index
    %c0_41 = arith.constant 0 : index
    %30 = tpu.strided_load %arg5[%c3, %c0_41] {strides = array<i32: 8, 1>} : memref<32x24xf32, #tpu.memory_space<vmem>>, vector<4x24xf32>
    %c0_42 = arith.constant 0 : index
    %c72 = arith.constant 72 : index
    %31 = vector.load %arg6[%c0_42, %c72] : memref<4x192xf32, #tpu.memory_space<vmem>>, vector<4x24xf32>
    tpu.vector_store %arg6[%c0_42, %c72], %30 {strides = array<i32>} : memref<4x192xf32, #tpu.memory_space<vmem>>, vector<4x24xf32>,
    %c4 = arith.constant 4 : index
    %c0_43 = arith.constant 0 : index
    %32 = tpu.strided_load %arg5[%c4, %c0_43] {strides = array<i32: 8, 1>} : memref<32x24xf32, #tpu.memory_space<vmem>>, vector<4x24xf32>
    %c0_44 = arith.constant 0 : index
    %c96 = arith.constant 96 : index
    %33 = vector.load %arg6[%c0_44, %c96] : memref<4x192xf32, #tpu.memory_space<vmem>>, vector<4x24xf32>
    tpu.vector_store %arg6[%c0_44, %c96], %32 {strides = array<i32>} : memref<4x192xf32, #tpu.memory_space<vmem>>, vector<4x24xf32>,
    %c5 = arith.constant 5 : index
    %c0_45 = arith.constant 0 : index
    %34 = tpu.strided_load %arg5[%c5, %c0_45] {strides = array<i32: 8, 1>} : memref<32x24xf32, #tpu.memory_space<vmem>>, vector<4x24xf32>
    %c0_46 = arith.constant 0 : index
    %c120 = arith.constant 120 : index
    %35 = vector.load %arg6[%c0_46, %c120] : memref<4x192xf32, #tpu.memory_space<vmem>>, vector<4x24xf32>
    tpu.vector_store %arg6[%c0_46, %c120], %34 {strides = array<i32>} : memref<4x192xf32, #tpu.memory_space<vmem>>, vector<4x24xf32>,
    %c6 = arith.constant 6 : index
    %c0_47 = arith.constant 0 : index
    %36 = tpu.strided_load %arg5[%c6, %c0_47] {strides = array<i32: 8, 1>} : memref<32x24xf32, #tpu.memory_space<vmem>>, vector<4x24xf32>
    %c0_48 = arith.constant 0 : index
    %c144 = arith.constant 144 : index
    %37 = vector.load %arg6[%c0_48, %c144] : memref<4x192xf32, #tpu.memory_space<vmem>>, vector<4x24xf32>
    tpu.vector_store %arg6[%c0_48, %c144], %36 {strides = array<i32>} : memref<4x192xf32, #tpu.memory_space<vmem>>, vector<4x24xf32>,
    %c7 = arith.constant 7 : index
    %c0_49 = arith.constant 0 : index
    %38 = tpu.strided_load %arg5[%c7, %c0_49] {strides = array<i32: 8, 1>} : memref<32x24xf32, #tpu.memory_space<vmem>>, vector<4x24xf32>
    %c0_50 = arith.constant 0 : index
    %c168 = arith.constant 168 : index
    %39 = vector.load %arg6[%c0_50, %c168] : memref<4x192xf32, #tpu.memory_space<vmem>>, vector<4x24xf32>
    tpu.vector_store %arg6[%c0_50, %c168], %38 {strides = array<i32>} : memref<4x192xf32, #tpu.memory_space<vmem>>, vector<4x24xf32>,
    %c0_51 = arith.constant 0 : index
    %c0_52 = arith.constant 0 : index
    %40 = vector.load %arg6[%c0_51, %c0_52] : memref<4x192xf32, #tpu.memory_space<vmem>>, vector<4x192xf32>
    %c0_53 = arith.constant 0 : index
    %c0_54 = arith.constant 0 : index
    %41 = vector.load %arg2[%c0_53, %c0_54] : memref<192x128xf32, #tpu.memory_space<vmem>>, vector<192x128xf32>
    %cst = arith.constant dense<0.000000e+00> : vector<4x128xf32>
    %42 = tpu.matmul %40, %41, %cst {dimension_numbers = #tpu.dot_dimension_numbers<[1], [0], [0], [1], [0, 0, 1, 1], [], []>} : vector<4x192xf32>, vector<192x128xf32>, vector<4x128xf32> -> vector<4x128xf32>
    %c0_55 = arith.constant 0 : index
    %c0_56 = arith.constant 0 : index
    %43 = vector.load %arg3[%c0_55, %c0_56] : memref<1x128xf32, #tpu.memory_space<vmem>>, vector<1x128xf32>
    %44 = vector.broadcast %43 : vector<1x128xf32> to vector<4x128xf32>
    %45 = arith.addf %42, %44 : vector<4x128xf32>
    %c0_57 = arith.constant 0 : index
    %c0_58 = arith.constant 0 : index
    %c0_59 = arith.constant 0 : index
    %46 = vector.load %arg4[%c0_57, %c0_58, %c0_59] : memref<1x4x128xf32, #tpu.memory_space<vmem>>, vector<1x4x128xf32>
    %47 = vector.shape_cast %46 : vector<1x4x128xf32> to vector<4x128xf32>
    %48 = vector.shape_cast %45 : vector<4x128xf32> to vector<1x4x128xf32>
    tpu.vector_store %arg4[%c0_57, %c0_58, %c0_59], %48 {strides = array<i32>} : memref<1x4x128xf32, #tpu.memory_space<vmem>>, vector<1x4x128xf32>,
    return
  }
  func.func @transform_0(%arg0: i32) -> (i32, i32, i32, i32) {
    %c0_i32 = arith.constant 0 : i32
    %c0_i32_0 = arith.constant 0 : i32
    %c0_i32_1 = arith.constant 0 : i32
    %c0_i32_2 = arith.constant 0 : i32
    return %arg0, %c0_i32, %c0_i32_0, %c0_i32_1 : i32, i32, i32, i32
  }
  func.func @transform_1(%arg0: i32) -> (i32, i32) {
    %c0_i32 = arith.constant 0 : i32
    %c0_i32_0 = arith.constant 0 : i32
    %c0_i32_1 = arith.constant 0 : i32
    return %c0_i32, %c0_i32_0 : i32, i32
  }
  func.func @transform_2(%arg0: i32) -> (i32, i32) {
    %c0_i32 = arith.constant 0 : i32
    %c0_i32_0 = arith.constant 0 : i32
    %c0_i32_1 = arith.constant 0 : i32
    return %c0_i32, %c0_i32_0 : i32, i32
  }
  func.func @transform_3(%arg0: i32) -> (i32, i32, i32) {
    %c0_i32 = arith.constant 0 : i32
    %c0_i32_0 = arith.constant 0 : i32
    %c0_i32_1 = arith.constant 0 : i32
    return %arg0, %c0_i32, %c0_i32_0 : i32, i32, i32
  }
}

</mosaic_0001>

<llo_original>
// kernel: tpu_custom_call.1
$region0: #{tpu_custom_call.1}
  #allocation0 [shape = 'u32[]', space=smem, size = 0x4, offset = 0x4, fixed_abs, tag = 'smem constant byte address 0x4 - core index']
  #allocation1 [shape = 'u32[72,128]{1,0:T(1,128)}', space=vmem, size = 0x9000, scoped, tag = 'internal scratch']
  #allocation2 [shape = 'f32[32,24]{1,0:T(8,128)}', space=vmem, size = 0x4000, scoped, tag = 'scratch operand']
  #allocation3 [shape = 'f32[4,192]{1,0:T(4,128)}', space=vmem, size = 0x1000, scoped, tag = 'scratch operand']
  %s0 = inlined_call_operand.hbm [shape: f32[2,3,16,16], index: 0, kind: input, shape index: {}]
  %s1 = inlined_call_operand.hbm [shape: f32[192,128], index: 1, kind: input, shape index: {}]
  %s2 = inlined_call_operand.vmem [shape: f32[1,128], index: 2, kind: input, shape index: {}]
  %s3 = inlined_call_operand.hbm [shape: f32[2,4,128], index: 3, kind: output, shape index: {}]
  %s4 = sld [smem:[#allocation0]]
  $region53: #{tpu_custom_call.1} parent=0
    _
  %s6 = ssub.s32 1, %s4
  %s7 = scalar_select 0, %s6, %s4
  $region1: #{tpu_custom_call.1} parent=0
    #allocation4 [shape = 'u8[49152]{0}', space=vmem, size = 0xc000, scoped, tag = 'input window, operand 0']
    #allocation5 [shape = 's32[2]{0}', space=sflag, size = 0x8, scoped, tag = 'scoped memory for tpu_custom_call.1']
    #allocation6 [shape = 's32[2]{0}', space=sflag, size = 0x8, scoped, tag = 'scoped memory for tpu_custom_call.1']
    #allocation7 [shape = 'u8[98304]{0}', space=vmem, size = 0x18000, scoped, tag = 'input window, operand 1, single buffered']
    #allocation8 [shape = 's32[1]{0}', space=sflag, size = 0x4, scoped, tag = 'scoped memory for tpu_custom_call.1']
    #allocation9 [shape = 'u8[4096]{0}', space=vmem, size = 0x1000, scoped, tag = 'output window, operand 0']
    %8 = vsyncpa [#allocation5], 0
    %s9 = scalar_lea.sflag [#allocation5], 1
    %10 = vsyncpa %s9, 0
    %11 = vsyncpa [#allocation8], 0
    %12 = vsyncpa [#allocation6], 0
    %s13 = scalar_lea.sflag [#allocation6], 1
    %14 = vsyncpa %s13, 0
    loop: start=0, step=1, limit=4
    $region2: #{tpu_custom_call.1} parent=1 // loop_pre_header
      _
    $region3: #{tpu_custom_call.1} parent=1 // loop_header
      %s16 = sphi 0, %s20
      %p17 = scmp.ge.s32.totalorder %s16, 4
      %s26 = sphi 0, %s28
      %s29 = sphi 0, %s26
      %s30 = sphi 0, %s29
      %s46 = sphi 0, %s30
      %s50 = sphi 0, %s50
      %s52 = sphi 0, %s50
      %s53 = sphi 0, %s52
      %s67 = sphi 0, %s53
      %s71 = sphi 0, %s71
      %s73 = sphi 0, %s71
      %s74 = sphi 0, %s73
      %s88 = sphi 0, %s74
      %s94 = sphi 0, %s96
      %s97 = sphi 0, %s94
      %s98 = sphi 0, %s97
      %s114 = sphi 0, %s98
    $region4: #{tpu_custom_call.1} parent=1 // loop_header_branch
      %19 = sbr.rel (%p17) target = $region8
    $region5: #{tpu_custom_call.1} parent=1 // loop_body
      %s21 = ssub.s32 %s16, 1
      %s22 = ssub.s32 %s16, 2
      %s23 = sadd.s32 %s16, 1
      %s24 = ssub.s32 %s16, %s23
      %p25 = scmp.eq.s32.totalorder %s24, 0
      %s27 = sadd.s32 %s26, 1
      %s28 = scalar_select %p25, %s26, %s27
      %p31 = pneg %p25
      %p32 = scmp.eq.s32.totalorder %s16, 1
      %p33 = por %p31, %p32
      %p34 = scmp.ne.s32.totalorder %s26, %s29
      %p35 = scmp.eq.s32.totalorder %s16, 0
      %p36 = por %p34, %p35
      %p37 = scmp.ne.s32.totalorder %s26, %s29
      %p38 = scmp.eq.s32.totalorder %s21, 1
      %p39 = por %p37, %p38
      %p40 = scmp.ne.s32.totalorder %s29, %s30
      %p41 = scmp.eq.s32.totalorder %s21, 0
      %p42 = por %p40, %p41
      %p43 = scmp.ne.s32.totalorder %s29, %s30
      %p44 = scmp.eq.s32.totalorder %s22, 1
      %p45 = por %p43, %p44
      %p47 = scmp.ne.s32.totalorder %s30, %s46
      %p48 = scmp.eq.s32.totalorder %s22, 0
      %p49 = por %p47, %p48
      %s51 = sadd.s32 %s50, 1
      %p54 = scmp.eq.s32.totalorder %s16, 1
      %p55 = scmp.ne.s32.totalorder %s50, %s52
      %p56 = scmp.eq.s32.totalorder %s16, 0
      %p57 = por %p55, %p56
      %p58 = scmp.ne.s32.totalorder %s50, %s52
      %p59 = scmp.eq.s32.totalorder %s21, 1
      %p60 = por %p58, %p59
      %p61 = scmp.ne.s32.totalorder %s52, %s53
      %p62 = scmp.eq.s32.totalorder %s21, 0
      %p63 = por %p61, %p62
      %p64 = scmp.ne.s32.totalorder %s52, %s53
      %p65 = scmp.eq.s32.totalorder %s22, 1
      %p66 = por %p64, %p65
      %p68 = scmp.ne.s32.totalorder %s53, %s67
      %p69 = scmp.eq.s32.totalorder %s22, 0
      %p70 = por %p68, %p69
      %s72 = sadd.s32 %s71, 1
      %p75 = scmp.eq.s32.totalorder %s16, 1
      %p76 = scmp.ne.s32.totalorder %s71, %s73
      %p77 = scmp.eq.s32.totalorder %s16, 0
      %p78 = por %p76, %p77
      %p79 = scmp.ne.s32.totalorder %s71, %s73
      %p80 = scmp.eq.s32.totalorder %s21, 1
      %p81 = por %p79, %p80
      %p82 = scmp.ne.s32.totalorder %s73, %s74
      %p83 = scmp.eq.s32.totalorder %s21, 0
      %p84 = por %p82, %p83
      %p85 = scmp.ne.s32.totalorder %s73, %s74
      %p86 = scmp.eq.s32.totalorder %s22, 1
      %p87 = por %p85, %p86
      %p89 = scmp.ne.s32.totalorder %s74, %s88
      %p90 = scmp.eq.s32.totalorder %s22, 0
      %p91 = por %p89, %p90
      %s92 = ssub.s32 %s16, %s23
      %p93 = scmp.eq.s32.totalorder %s92, 0
      %s95 = sadd.s32 %s94, 1
      %s96 = scalar_select %p93, %s94, %s95
      %p99 = pneg %p93
      %p100 = scmp.eq.s32.totalorder %s16, 1
      %p101 = por %p99, %p100
      %p102 = scmp.ne.s32.totalorder %s94, %s97
      %p103 = scmp.eq.s32.totalorder %s16, 0
      %p104 = por %p102, %p103
      %p105 = scmp.ne.s32.totalorder %s94, %s97
      %p106 = scmp.eq.s32.totalorder %s21, 1
      %p107 = por %p105, %p106
      %p108 = scmp.ne.s32.totalorder %s97, %s98
      %p109 = scmp.eq.s32.totalorder %s21, 0
      %p110 = por %p108, %p109
      %p111 = scmp.ne.s32.totalorder %s97, %s98
      %p112 = scmp.eq.s32.totalorder %s22, 1
      %p113 = por %p111, %p112
      %p115 = scmp.ne.s32.totalorder %s98, %s114
      %p116 = scmp.eq.s32.totalorder %s22, 0
      %p117 = por %p115, %p116
      %p118 = scmp.le.s32.totalorder 1, %s16
      %p119 = scmp.lt.s32.totalorder %s16, 3
      %p120 = pnand %p118, %p119
      %p121 = pneg %p120
      // Predicated region
      $region9: #{tpu_custom_call.1} parent=5 // pred_check
        _
      $region10: #{tpu_custom_call.1} parent=5 // pred_check_branch
        %123 = sbr.rel (%p120) target = $region12
      $region11: #{tpu_custom_call.1} parent=5 // pred_region
        %s124 = ssub.s32 %s16, 1
        // Predicated region
        $region13: #{tpu_custom_call.1} parent=11 // pred_check
          %p125 = pneg %p63
        $region14: #{tpu_custom_call.1} parent=11 // pred_check_branch
          %127 = sbr.rel (%p125) target = $region16
        $region15: #{tpu_custom_call.1} parent=11 // pred_region
          %129 = vsyncadd [#allocation8], 0
          %s130 = sshll.u32 %s1, 4
          %s131 = int_to_ptr.hbm [resolvable:$true] %s130
          %s132 = sshll.u32 [#allocation7], 4
          %s133 = int_to_ptr.vmem [resolvable:$true] %s132
          %138 = dma.hbm_to_vmem [thread:$0]  %s131, 3072, %s133, [#allocation8], 128, 128, 8
        $region16: #{tpu_custom_call.1} parent=11 // pred_fallthru
          _
        // Predicated region
        $region17: #{tpu_custom_call.1} parent=11 // pred_check
          %p139 = pneg %p84
        $region18: #{tpu_custom_call.1} parent=11 // pred_check_branch
          %141 = sbr.rel (%p139) target = $region20
        $region19: #{tpu_custom_call.1} parent=11 // pred_region
          _
        $region20: #{tpu_custom_call.1} parent=11 // pred_fallthru
          _
      $region12: #{tpu_custom_call.1} parent=5 // pred_fallthru
        _
      %p142 = scmp.lt.s32.totalorder %s16, 2
      // Predicated region
      $region21: #{tpu_custom_call.1} parent=5 // pred_check
        %p143 = pneg %p142
      $region22: #{tpu_custom_call.1} parent=5 // pred_check_branch
        %145 = sbr.rel (%p143) target = $region24
      $region23: #{tpu_custom_call.1} parent=5 // pred_region
        // Predicated region
        $region25: #{tpu_custom_call.1} parent=23 // pred_check
          %p146 = pneg %p36
        $region26: #{tpu_custom_call.1} parent=23 // pred_check_branch
          %148 = sbr.rel (%p146) target = $region28
        $region27: #{tpu_custom_call.1} parent=23 // pred_region
          %s149 = sand.u32 %s26, 1
          %s150 = scalar_lea.sflag [#allocation5], %s149
          %s151 = sand.u32 %s26, 1
          %s152 = smul.addr %s151, 48
          %s153 = scalar_lea.vmem [#allocation4], %s152
          %155 = vsyncadd %s150, 0
          %s156 = smul.addr %s16, 6
          %s157 = smul.addr %s156, 8
          %s158 = scalar_lea.hbm %s0, %s157
          %s159 = sshll.u32 %s158, 4
          %s160 = int_to_ptr.hbm [resolvable:$true] %s159
          %s161 = sshll.u32 %s153, 4
          %s162 = int_to_ptr.vmem [resolvable:$true] %s161
          %167 = dma.hbm_to_vmem [thread:$0]  %s160, 768, %s162, %s150, 128, 128, 8
        $region28: #{tpu_custom_call.1} parent=23 // pred_fallthru
          _
      $region24: #{tpu_custom_call.1} parent=5 // pred_fallthru
        _
      %p168 = scmp.le.s32.totalorder 1, %s16
      %p169 = scmp.lt.s32.totalorder %s16, 3
      %p170 = pnand %p168, %p169
      %p171 = pneg %p170
      // Predicated region
      $region29: #{tpu_custom_call.1} parent=5 // pred_check
        _
      $region30: #{tpu_custom_call.1} parent=5 // pred_check_branch
        %173 = sbr.rel (%p170) target = $region32
      $region31: #{tpu_custom_call.1} parent=5 // pred_region
        %s174 = ssub.s32 %s16, 1
        %s175 = sand.u32 %s29, 1
        %s176 = scalar_lea.sflag [#allocation5], %s175
        %s177 = sand.u32 %s29, 1
        %s178 = smul.addr %s177, 48
        %s179 = scalar_lea.vmem [#allocation4], %s178
        // Predicated region
        $region33: #{tpu_custom_call.1} parent=31 // pred_check
          %p180 = pneg %p42
        $region34: #{tpu_custom_call.1} parent=31 // pred_check_branch
          %182 = sbr.rel (%p180) target = $region36
        $region35: #{tpu_custom_call.1} parent=31 // pred_region
          %184 = dma.done %s176, 768
        $region36: #{tpu_custom_call.1} parent=31 // pred_fallthru
          _
        // Predicated region
        $region37: #{tpu_custom_call.1} parent=31 // pred_check
          %p185 = pneg %p63
        $region38: #{tpu_custom_call.1} parent=31 // pred_check_branch
          %187 = sbr.rel (%p185) target = $region40
        $region39: #{tpu_custom_call.1} parent=31 // pred_region
          %189 = dma.done [#allocation8], 3072
        $region40: #{tpu_custom_call.1} parent=31 // pred_fallthru
          _
        %s190 = sand.u32 %s29, 1
        %s191 = scalar_lea.sflag [#allocation5], %s190
        %s192 = sand.u32 %s29, 1
        %s193 = smul.addr %s192, 48
        %s194 = scalar_lea.vmem [#allocation4], %s193
        %p195 = pneg %p42
        %p196 = pneg %p39
        %p197 = pneg %p63
        %p198 = pneg %p60
        %p199 = pneg %p84
        %p200 = pneg %p81
        %p201 = pneg %p110
        %p202 = pneg %p107
        %s203 = sand.u32 %s97, 1
        %s204 = scalar_lea.sflag [#allocation6], %s203
        %s205 = sand.u32 %s97, 1
        %s206 = smul.addr %s205, 4
        %s207 = scalar_lea.vmem [#allocation9], %s206
        %v208 = vld [vmem:[%s179] sm:$0xff]
        %209 = vxpose.xlu0.b32.start [1/16] %v208, 128
        %210 = vxpose.xlu0.b32.cont [2/16] 0.0, 128
        %211 = vxpose.xlu0.b32.cont [3/16] 0.0, 128
        %212 = vxpose.xlu0.b32.cont [4/16] 0.0, 128
        %213 = vxpose.xlu0.b32.cont [5/16] 0.0, 128
        %214 = vxpose.xlu0.b32.cont [6/16] 0.0, 128
        %215 = vxpose.xlu0.b32.cont [7/16] 0.0, 128
        %216 = vxpose.xlu0.b32.cont [8/16] 0.0, 128
        %217 = vxpose.xlu0.b32.cont [9/16] 0.0, 128
        %218 = vxpose.xlu0.b32.cont [10/16] 0.0, 128
        %219 = vxpose.xlu0.b32.cont [11/16] 0.0, 128
        %220 = vxpose.xlu0.b32.cont [12/16] 0.0, 128
        %221 = vxpose.xlu0.b32.cont [13/16] 0.0, 128
        %222 = vxpose.xlu0.b32.cont [14/16] 0.0, 128
        %223 = vxpose.xlu0.b32.cont [15/16] 0.0, 128
        %224 = vxpose.xlu0.b32.end [16/16] 0.0, 128
        %v225 = vpop.trf.xlu0
        %v226 = vpop.trf.xlu0
        %v227 = vpop.trf.xlu0
        %v228 = vpop.trf.xlu0
        %v229 = vpop.trf.xlu0
        %v230 = vpop.trf.xlu0
        %v231 = vpop.trf.xlu0
        %v232 = vpop.trf.xlu0
        %v233 = vpop.trf.xlu0
        %v234 = vpop.trf.xlu0
        %v235 = vpop.trf.xlu0
        %v236 = vpop.trf.xlu0
        %v237 = vpop.trf.xlu0
        %v238 = vpop.trf.xlu0
        %v239 = vpop.trf.xlu0
        %v240 = vpop.trf.xlu0
        %vm241 = vcmask 64512
        %242 = vst.msk [vmem:[#allocation2] sm:$0xff] %vm241, %v225
        %243 = vst.msk [vmem:[#allocation2 + $0x8] sm:$0xff] %vm241, %v226
        %s244 = scalar_lea.vmem %s179, 16 [#allocation4]
        %v245 = vld [vmem:[%s244] sm:$0xff]
        %246 = vxpose.xlu0.b32.start [1/16] %v245, 128
        %247 = vxpose.xlu0.b32.cont [2/16] 0.0, 128
        %248 = vxpose.xlu0.b32.cont [3/16] 0.0, 128
        %249 = vxpose.xlu0.b32.cont [4/16] 0.0, 128
        %250 = vxpose.xlu0.b32.cont [5/16] 0.0, 128
        %251 = vxpose.xlu0.b32.cont [6/16] 0.0, 128
        %252 = vxpose.xlu0.b32.cont [7/16] 0.0, 128
        %253 = vxpose.xlu0.b32.cont [8/16] 0.0, 128
        %254 = vxpose.xlu0.b32.cont [9/16] 0.0, 128
        %255 = vxpose.xlu0.b32.cont [10/16] 0.0, 128
        %256 = vxpose.xlu0.b32.cont [11/16] 0.0, 128
        %257 = vxpose.xlu0.b32.cont [12/16] 0.0, 128
        %258 = vxpose.xlu0.b32.cont [13/16] 0.0, 128
        %259 = vxpose.xlu0.b32.cont [14/16] 0.0, 128
        %260 = vxpose.xlu0.b32.cont [15/16] 0.0, 128
        %261 = vxpose.xlu0.b32.end [16/16] 0.0, 128
        %v262 = vpop.trf.xlu0
        %v263 = vpop.trf.xlu0
        %v264 = vpop.trf.xlu0
        %v265 = vpop.trf.xlu0
        %v266 = vpop.trf.xlu0
        %v267 = vpop.trf.xlu0
        %v268 = vpop.trf.xlu0
        %v269 = vpop.trf.xlu0
        %v270 = vpop.trf.xlu0
        %v271 = vpop.trf.xlu0
        %v272 = vpop.trf.xlu0
        %v273 = vpop.trf.xlu0
        %v274 = vpop.trf.xlu0
        %v275 = vpop.trf.xlu0
        %v276 = vpop.trf.xlu0
        %v277 = vpop.trf.xlu0
        %280 = vrot.lane.b32.xlu0 %v262, 8
        %v281 = vpop.permute.xlu0 %280
        %282 = vrot.lane.b32.xlu0 %v263, 8
        %v283 = vpop.permute.xlu0 %282
        %vm286 = vcmask 130112
        %287 = vst.msk [vmem:[#allocation2] sm:$0xff] %vm286, %v281
        %288 = vst.msk [vmem:[#allocation2 + $0x8] sm:$0xff] %vm286, %v283
        %s289 = scalar_lea.vmem %s179, 32 [#allocation4]
        %v290 = vld [vmem:[%s289] sm:$0xff]
        %291 = vxpose.xlu0.b32.start [1/16] %v290, 128
        %292 = vxpose.xlu0.b32.cont [2/16] 0.0, 128
        %293 = vxpose.xlu0.b32.cont [3/16] 0.0, 128
        %294 = vxpose.xlu0.b32.cont [4/16] 0.0, 128
        %295 = vxpose.xlu0.b32.cont [5/16] 0.0, 128
        %296 = vxpose.xlu0.b32.cont [6/16] 0.0, 128
        %297 = vxpose.xlu0.b32.cont [7/16] 0.0, 128
        %298 = vxpose.xlu0.b32.cont [8/16] 0.0, 128
        %299 = vxpose.xlu0.b32.cont [9/16] 0.0, 128
        %300 = vxpose.xlu0.b32.cont [10/16] 0.0, 128
        %301 = vxpose.xlu0.b32.cont [11/16] 0.0, 128
        %302 = vxpose.xlu0.b32.cont [12/16] 0.0, 128
        %303 = vxpose.xlu0.b32.cont [13/16] 0.0, 128
        %304 = vxpose.xlu0.b32.cont [14/16] 0.0, 128
        %305 = vxpose.xlu0.b32.cont [15/16] 0.0, 128
        %306 = vxpose.xlu0.b32.end [16/16] 0.0, 128
        %v307 = vpop.trf.xlu0
        %v308 = vpop.trf.xlu0
        %v309 = vpop.trf.xlu0
        %v310 = vpop.trf.xlu0
        %v311 = vpop.trf.xlu0
        %v312 = vpop.trf.xlu0
        %v313 = vpop.trf.xlu0
        %v314 = vpop.trf.xlu0
        %v315 = vpop.trf.xlu0
        %v316 = vpop.trf.xlu0
        %v317 = vpop.trf.xlu0
        %v318 = vpop.trf.xlu0
        %v319 = vpop.trf.xlu0
        %v320 = vpop.trf.xlu0
        %v321 = vpop.trf.xlu0
        %v322 = vpop.trf.xlu0
        %325 = vrot.lane.b32.xlu0 %v307, 16
        %v326 = vpop.permute.xlu0 %325
        %327 = vrot.lane.b32.xlu0 %v308, 16
        %v328 = vpop.permute.xlu0 %327
        %vm331 = vcmask 195712
        %332 = vst.msk [vmem:[#allocation2] sm:$0xff] %vm331, %v326
        %333 = vst.msk [vmem:[#allocation2 + $0x8] sm:$0xff] %vm331, %v328
        %v334 = vld [vmem:[%s179 + $0x8] sm:$0xff]
        %335 = vxpose.xlu0.b32.start [1/16] %v334, 128
        %336 = vxpose.xlu0.b32.cont [2/16] 0.0, 128
        %337 = vxpose.xlu0.b32.cont [3/16] 0.0, 128
        %338 = vxpose.xlu0.b32.cont [4/16] 0.0, 128
        %339 = vxpose.xlu0.b32.cont [5/16] 0.0, 128
        %340 = vxpose.xlu0.b32.cont [6/16] 0.0, 128
        %341 = vxpose.xlu0.b32.cont [7/16] 0.0, 128
        %342 = vxpose.xlu0.b32.cont [8/16] 0.0, 128
        %343 = vxpose.xlu0.b32.cont [9/16] 0.0, 128
        %344 = vxpose.xlu0.b32.cont [10/16] 0.0, 128
        %345 = vxpose.xlu0.b32.cont [11/16] 0.0, 128
        %346 = vxpose.xlu0.b32.cont [12/16] 0.0, 128
        %347 = vxpose.xlu0.b32.cont [13/16] 0.0, 128
        %348 = vxpose.xlu0.b32.cont [14/16] 0.0, 128
        %349 = vxpose.xlu0.b32.cont [15/16] 0.0, 128
        %350 = vxpose.xlu0.b32.end [16/16] 0.0, 128
        %v351 = vpop.trf.xlu0
        %v352 = vpop.trf.xlu0
        %v353 = vpop.trf.xlu0
        %v354 = vpop.trf.xlu0
        %v355 = vpop.trf.xlu0
        %v356 = vpop.trf.xlu0
        %v357 = vpop.trf.xlu0
        %v358 = vpop.trf.xlu0
        %v359 = vpop.trf.xlu0
        %v360 = vpop.trf.xlu0
        %v361 = vpop.trf.xlu0
        %v362 = vpop.trf.xlu0
        %v363 = vpop.trf.xlu0
        %v364 = vpop.trf.xlu0
        %v365 = vpop.trf.xlu0
        %v366 = vpop.trf.xlu0
        %367 = vst.msk [vmem:[#allocation2 + $0x10] sm:$0xff] %vm241, %v351
        %368 = vst.msk [vmem:[#allocation2 + $0x18] sm:$0xff] %vm241, %v352
        %v369 = vld [vmem:[%s244 + $0x8] sm:$0xff]
        %370 = vxpose.xlu0.b32.start [1/16] %v369, 128
        %371 = vxpose.xlu0.b32.cont [2/16] 0.0, 128
        %372 = vxpose.xlu0.b32.cont [3/16] 0.0, 128
        %373 = vxpose.xlu0.b32.cont [4/16] 0.0, 128
        %374 = vxpose.xlu0.b32.cont [5/16] 0.0, 128
        %375 = vxpose.xlu0.b32.cont [6/16] 0.0, 128
        %376 = vxpose.xlu0.b32.cont [7/16] 0.0, 128
        %377 = vxpose.xlu0.b32.cont [8/16] 0.0, 128
        %378 = vxpose.xlu0.b32.cont [9/16] 0.0, 128
        %379 = vxpose.xlu0.b32.cont [10/16] 0.0, 128
        %380 = vxpose.xlu0.b32.cont [11/16] 0.0, 128
        %381 = vxpose.xlu0.b32.cont [12/16] 0.0, 128
        %382 = vxpose.xlu0.b32.cont [13/16] 0.0, 128
        %383 = vxpose.xlu0.b32.cont [14/16] 0.0, 128
        %384 = vxpose.xlu0.b32.cont [15/16] 0.0, 128
        %385 = vxpose.xlu0.b32.end [16/16] 0.0, 128
        %v386 = vpop.trf.xlu0
        %v387 = vpop.trf.xlu0
        %v388 = vpop.trf.xlu0
        %v389 = vpop.trf.xlu0
        %v390 = vpop.trf.xlu0
        %v391 = vpop.trf.xlu0
        %v392 = vpop.trf.xlu0
        %v393 = vpop.trf.xlu0
        %v394 = vpop.trf.xlu0
        %v395 = vpop.trf.xlu0
        %v396 = vpop.trf.xlu0
        %v397 = vpop.trf.xlu0
        %v398 = vpop.trf.xlu0
        %v399 = vpop.trf.xlu0
        %v400 = vpop.trf.xlu0
        %v401 = vpop.trf.xlu0
        %404 = vrot.lane.b32.xlu0 %v386, 8
        %v405 = vpop.permute.xlu0 %404
        %406 = vrot.lane.b32.xlu0 %v387, 8
        %v407 = vpop.permute.xlu0 %406
        %410 = vst.msk [vmem:[#allocation2 + $0x10] sm:$0xff] %vm286, %v405
        %411 = vst.msk [vmem:[#allocation2 + $0x18] sm:$0xff] %vm286, %v407
        %v412 = vld [vmem:[%s289 + $0x8] sm:$0xff]
        %413 = vxpose.xlu0.b32.start [1/16] %v412, 128
        %414 = vxpose.xlu0.b32.cont [2/16] 0.0, 128
        %415 = vxpose.xlu0.b32.cont [3/16] 0.0, 128
        %416 = vxpose.xlu0.b32.cont [4/16] 0.0, 128
        %417 = vxpose.xlu0.b32.cont [5/16] 0.0, 128
        %418 = vxpose.xlu0.b32.cont [6/16] 0.0, 128
        %419 = vxpose.xlu0.b32.cont [7/16] 0.0, 128
        %420 = vxpose.xlu0.b32.cont [8/16] 0.0, 128
        %421 = vxpose.xlu0.b32.cont [9/16] 0.0, 128
        %422 = vxpose.xlu0.b32.cont [10/16] 0.0, 128
        %423 = vxpose.xlu0.b32.cont [11/16] 0.0, 128
        %424 = vxpose.xlu0.b32.cont [12/16] 0.0, 128
        %425 = vxpose.xlu0.b32.cont [13/16] 0.0, 128
        %426 = vxpose.xlu0.b32.cont [14/16] 0.0, 128
        %427 = vxpose.xlu0.b32.cont [15/16] 0.0, 128
        %428 = vxpose.xlu0.b32.end [16/16] 0.0, 128
        %v429 = vpop.trf.xlu0
        %v430 = vpop.trf.xlu0
        %v431 = vpop.trf.xlu0
        %v432 = vpop.trf.xlu0
        %v433 = vpop.trf.xlu0
        %v434 = vpop.trf.xlu0
        %v435 = vpop.trf.xlu0
        %v436 = vpop.trf.xlu0
        %v437 = vpop.trf.xlu0
        %v438 = vpop.trf.xlu0
        %v439 = vpop.trf.xlu0
        %v440 = vpop.trf.xlu0
        %v441 = vpop.trf.xlu0
        %v442 = vpop.trf.xlu0
        %v443 = vpop.trf.xlu0
        %v444 = vpop.trf.xlu0
        %447 = vrot.lane.b32.xlu0 %v429, 16
        %v448 = vpop.permute.xlu0 %447
        %449 = vrot.lane.b32.xlu0 %v430, 16
        %v450 = vpop.permute.xlu0 %449
        %453 = vst.msk [vmem:[#allocation2 + $0x10] sm:$0xff] %vm331, %v448
        %454 = vst.msk [vmem:[#allocation2 + $0x18] sm:$0xff] %vm331, %v450
        %v455 = vld [vmem:[#allocation2] ss:$8 sm:$0xf]
        %vm456 = vcmask 191488
        %457 = vst.msk [vmem:[#allocation3] sm:$0xf] %vm456, %v455
        %s458 = scalar_lea.vmem [#allocation2], 1
        %v459 = vld [vmem:[%s458] ss:$8 sm:$0xf]
        %461 = vrot.lane.b32.xlu0 %v459, 24
        %v462 = vpop.permute.xlu0 %461
        %vm464 = vcmask 388288
        %465 = vst.msk [vmem:[#allocation3] sm:$0xf] %vm464, %v462
        %s466 = scalar_lea.vmem [#allocation2], 2
        %v467 = vld [vmem:[%s466] ss:$8 sm:$0xf]
        %469 = vrot.lane.b32.xlu0 %v467, 48
        %v470 = vpop.permute.xlu0 %469
        %vm472 = vcmask 585088
        %473 = vst.msk [vmem:[#allocation3] sm:$0xf] %vm472, %v470
        %s474 = scalar_lea.vmem [#allocation2], 3
        %v475 = vld [vmem:[%s474] ss:$8 sm:$0xf]
        %477 = vrot.lane.b32.xlu0 %v475, 72
        %v478 = vpop.permute.xlu0 %477
        %vm480 = vcmask 781888
        %481 = vst.msk [vmem:[#allocation3] sm:$0xf] %vm480, %v478
        %s482 = scalar_lea.vmem [#allocation2], 4
        %v483 = vld [vmem:[%s482] ss:$8 sm:$0xf]
        %485 = vrot.lane.b32.xlu0 %v483, 96
        %v486 = vpop.permute.xlu0 %485
        %vm488 = vcmask 978688
        %489 = vst.msk [vmem:[#allocation3] sm:$0xf] %vm488, %v486
        %s490 = scalar_lea.vmem [#allocation2], 5
        %v491 = vld [vmem:[%s490] ss:$8 sm:$0xf]
        %493 = vrot.lane.b32.xlu0 %v491, 120
        %v494 = vpop.permute.xlu0 %493
        %v495 = vrot.slane %v494, 4
        %vm496 = vcmask 982016
        %v497 = vsel %vm496, %v495, %v494
        %vm499 = vcmask 1044416
        %vm500 = vcmask 130052
        %vm501 = vmor %vm500, %vm499
        %502 = vst.msk [vmem:[#allocation3] sm:$0xff] %vm501, %v497
        %s503 = scalar_lea.vmem [#allocation2], 6
        %v504 = vld [vmem:[%s503] ss:$8 sm:$0xf]
        %506 = vrot.lane.b32.xlu0 %v504, 16
        %v507 = vpop.permute.xlu0 %506
        %vm509 = vcmask 322688
        %510 = vst.msk [vmem:[#allocation3 + $0x4] sm:$0xf] %vm509, %v507
        %s511 = scalar_lea.vmem [#allocation2], 7
        %v512 = vld [vmem:[%s511] ss:$8 sm:$0xf]
        %514 = vrot.lane.b32.xlu0 %v512, 40
        %v515 = vpop.permute.xlu0 %514
        %vm517 = vcmask 519488
        %518 = vst.msk [vmem:[#allocation3 + $0x4] sm:$0xf] %vm517, %v515
        %v519 = vld [vmem:[#allocation3] sm:$0xff]
        %v520 = vld [vmem:[#allocation7] sm:$0xff]
        %v521 = vld [vmem:[#allocation7 + $0x8] sm:$0xff]
        %v522 = vld [vmem:[#allocation7 + $0x10] sm:$0xff]
        %v523 = vld [vmem:[#allocation7 + $0x18] sm:$0xff]
        %v524 = vld [vmem:[#allocation7 + $0x20] sm:$0xff]
        %v525 = vld [vmem:[#allocation7 + $0x28] sm:$0xff]
        %v526 = vld [vmem:[#allocation7 + $0x30] sm:$0xff]
        %v527 = vld [vmem:[#allocation7 + $0x38] sm:$0xff]
        %v528 = vld [vmem:[#allocation7 + $0x40] sm:$0xff]
        %v529 = vld [vmem:[#allocation7 + $0x48] sm:$0xff]
        %v530 = vld [vmem:[#allocation7 + $0x50] sm:$0xff]
        %v531 = vld [vmem:[#allocation7 + $0x58] sm:$0xff]
        %v532 = vld [vmem:[#allocation7 + $0x60] sm:$0xff]
        %v533 = vld [vmem:[#allocation7 + $0x68] sm:$0xff]
        %v534 = vld [vmem:[#allocation7 + $0x70] sm:$0xff]
        %v535 = vld [vmem:[#allocation7 + $0x78] sm:$0xff]
        %v536 = vld [vmem:[#allocation7 + $0x80] sm:$0xff]
        %v537 = vld [vmem:[#allocation7 + $0x88] sm:$0xff]
        %v538 = vld [vmem:[#allocation7 + $0x90] sm:$0xff]
        %v539 = vld [vmem:[#allocation7 + $0x98] sm:$0xff]
        %v540 = vld [vmem:[#allocation7 + $0xa0] sm:$0xff]
        %v541 = vld [vmem:[#allocation7 + $0xa8] sm:$0xff]
        %v542 = vld [vmem:[#allocation7 + $0xb0] sm:$0xff]
        %v543 = vld [vmem:[#allocation7 + $0xb8] sm:$0xff]
        %v544 = vld [vmem:[%s2] sm:$0x1]
        %v546 = vperm.slane %v544, 0
        %549 = vst [vmem:[#allocation1] ss:$2 sm:$0xff] %v519
        %v550 = vld.sshfl [vmem:[#allocation1] sm:$0xff pattern:$0x75316420]
        %v551 = vld.sshfl [vmem:[#allocation1 + $0x8] sm:$0xff pattern:$0x75316420]
        %vm553 = vcmask 523264
        %v554 = vsel %vm553, %v551, 0
        %556 = vmatpush.msra.mxu0 %v535
        %557 = vmatpush.msra.mxu0 %v534
        %558 = vmatpush.msra.mxu0 %v533
        %559 = vmatpush.msra.mxu0 %v532
        %560 = vmatpush.msra.mxu0 %v531
        %561 = vmatpush.msra.mxu0 %v530
        %562 = vmatpush.msra.mxu0 %v529
        %563 = vmatpush.msra.mxu0 %v528
        %564 = vmatpush.msra.mxu0 %v527
        %565 = vmatpush.msra.mxu0 %v526
        %566 = vmatpush.msra.mxu0 %v525
        %567 = vmatpush.msra.mxu0 %v524
        %568 = vmatpush.msra.mxu0 %v523
        %569 = vmatpush.msra.mxu0 %v522
        %570 = vmatpush.msra.mxu0 %v521
        %571 = vmatpush.msra.mxu0 %v520
        %572 = vmatmul.f32.gmra.mxu0 %v550
        %v573 = vpop.f32.mrf.mxu0
        %v574 = vadd.f32 %v546, %v573
        %575 = vdwg.mxu0
        %576 = vmatpush.msra.mxu0 0.0
        %577 = vmatpush.msra.mxu0 0.0
        %578 = vmatpush.msra.mxu0 0.0
        %579 = vmatpush.msra.mxu0 0.0
        %580 = vmatpush.msra.mxu0 0.0
        %581 = vmatpush.msra.mxu0 0.0
        %582 = vmatpush.msra.mxu0 0.0
        %583 = vmatpush.msra.mxu0 0.0
        %584 = vmatpush.msra.mxu0 %v543
        %585 = vmatpush.msra.mxu0 %v542
        %586 = vmatpush.msra.mxu0 %v541
        %587 = vmatpush.msra.mxu0 %v540
        %588 = vmatpush.msra.mxu0 %v539
        %589 = vmatpush.msra.mxu0 %v538
        %590 = vmatpush.msra.mxu0 %v537
        %591 = vmatpush.msra.mxu0 %v536
        %592 = vmatmul.f32.gmra.mxu0 %v554
        %v593 = vpop.f32.mrf.mxu0
        %v594 = vadd.f32 %v574, %v593
        %595 = vdwg.mxu0
        %596 = vst [vmem:[%s207] sm:$0xf] %v594
        %s597 = sand.u32 %s97, 1
        %s598 = scalar_lea.sflag [#allocation6], %s597
        %s599 = sand.u32 %s97, 1
        %s600 = smul.addr %s599, 4
        %s601 = scalar_lea.vmem [#allocation9], %s600
        // Predicated region
        $region41: #{tpu_custom_call.1} parent=31 // pred_check
          %p602 = pneg %p107
        $region42: #{tpu_custom_call.1} parent=31 // pred_check_branch
          %604 = sbr.rel (%p602) target = $region44
        $region43: #{tpu_custom_call.1} parent=31 // pred_region
          %606 = vsyncadd %s598, 0
          %s607 = smul.addr %s21, 4
          %s608 = scalar_lea.hbm %s3, %s607
          %s610 = sshll.u32 %s601, 4
          %s611 = int_to_ptr.vmem [resolvable:$true] %s610
          %s612 = sshll.u32 %s608, 4
          %s613 = int_to_ptr.hbm [resolvable:$true] %s612
          %615 = dma.vmem_to_hbm [thread:$0]  %s611, 64, %s613, %s598
        $region44: #{tpu_custom_call.1} parent=31 // pred_fallthru
          _
      $region32: #{tpu_custom_call.1} parent=5 // pred_fallthru
        _
      %p616 = scmp.le.s32.totalorder 2, %s16
      // Predicated region
      $region45: #{tpu_custom_call.1} parent=5 // pred_check
        %p617 = pneg %p616
      $region46: #{tpu_custom_call.1} parent=5 // pred_check_branch
        %619 = sbr.rel (%p617) target = $region48
      $region47: #{tpu_custom_call.1} parent=5 // pred_region
        %s620 = ssub.s32 %s16, 2
        // Predicated region
        $region49: #{tpu_custom_call.1} parent=47 // pred_check
          %p621 = pneg %p113
        $region50: #{tpu_custom_call.1} parent=47 // pred_check_branch
          %623 = sbr.rel (%p621) target = $region52
        $region51: #{tpu_custom_call.1} parent=47 // pred_region
          %s624 = sand.u32 %s98, 1
          %s625 = scalar_lea.sflag [#allocation6], %s624
          %s626 = sand.u32 %s98, 1
          %s627 = smul.addr %s626, 4
          %s628 = scalar_lea.vmem [#allocation9], %s627
          %630 = dma.done %s625, 64
        $region52: #{tpu_custom_call.1} parent=47 // pred_fallthru
          _
      $region48: #{tpu_custom_call.1} parent=5 // pred_fallthru
        _
    $region6: #{tpu_custom_call.1} parent=1 // loop_footer
      %s20 = sadd.s32 1, %s16
    $region7: #{tpu_custom_call.1} parent=1 // loop_footer_branch
      %15 = sbr.rel target = $region3
    $region8: #{tpu_custom_call.1} parent=1 // loop_exit
      _
    %631 = vsyncpa [#allocation5], 1
    %s632 = scalar_lea.sflag [#allocation5], 1
    %633 = vsyncpa %s632, 1
    %634 = vsyncpa [#allocation8], 1
    %635 = vsyncpa [#allocation6], 1
    %s636 = scalar_lea.sflag [#allocation6], 1
    %637 = vsyncpa %s636, 1

</llo_original>
